<compile_context>
chip_gen: v7x
topology: tpu7x:2x2x1
jax: 0.10.0
libtpu: 0.0.40
codegen_flags: <defaults>
</compile_context>

<pallas_src>
import functools
import math

import jax
import jax.numpy as jnp
from jax.experimental import pallas as pl
from jax.experimental.pallas import tpu as pltpu


_STREAM_VMEM_BUDGET = 32 * 1024 * 1024  # budget for double-buffered x + out blocks
_LANE = 128

# (dimension_semantics, single_buffer_weights) chosen at the first successful
# compile and reused afterwards.
_ACTIVE_CONFIG = None


def _round_up(x: int, m: int) -> int:
    return ((x + m - 1) // m) * m


def _round_down(x: int, m: int) -> int:
    return (x // m) * m


def _sublane_pack(dtype) -> int:
    # vreg sublane packing: 8 rows for 4-byte, 16 for 2-byte, 32 for 1-byte dtypes.
    return max(8, 32 // jnp.dtype(dtype).itemsize)


def _pick_block_m(m, h_dim, zp, x_dtype, out_dtype, block_m=None) -> int:
    """Rows per grid step: as large as fits the streaming VMEM budget
    (double-buffered x block + out block), rounded to the dtype sublane pack,
    never larger than (rounded-up) M or the caller-supplied block_m."""
    sub = _sublane_pack(x_dtype)
    xb = jnp.dtype(x_dtype).itemsize
    ob = jnp.dtype(out_dtype).itemsize
    bytes_per_row = 2 * (h_dim * xb + zp * ob)  # x2 for double buffering
    tm = _round_down(max(_STREAM_VMEM_BUDGET // bytes_per_row, sub), sub)
    tm = min(tm, 1024)  # ~85% of HBM roofline already reached around 512 rows
    if block_m is not None:
        tm = min(tm, _round_up(int(block_m), sub))
    tm = min(tm, _round_up(m, sub))
    return max(tm, sub)


def _linear_kernel(x_ref, w_ref, b_ref, o_ref):
    # x_ref: [TM, H], w_ref: [H, Zp], b_ref: [1, Zp], o_ref: [TM, Zp]
    acc = jnp.dot(x_ref[...], w_ref[...], preferred_element_type=jnp.float32)
    o_ref[...] = (acc + b_ref[...].astype(jnp.float32)).astype(o_ref.dtype)


@functools.partial(
    jax.jit, static_argnames=("tm", "out_dim", "dim_sem", "single_buffer_w")
)
def _forward_2d(x2d, w_t, b2d, *, tm, out_dim, dim_sem, single_buffer_w):
    m, h_dim = x2d.shape
    zp = w_t.shape[1]

    xb = jnp.dtype(x2d.dtype).itemsize
    wb = jnp.dtype(w_t.dtype).itemsize
    ob = xb  # output dtype == input dtype

    # Weight / bias are VMEM-resident (constant index map); single-buffer them
    # when supported - a second copy of a never-changing block is pure waste.
    resident_kwargs = {}
    if single_buffer_w and hasattr(pl, "Buffered"):
        resident_kwargs["pipeline_mode"] = pl.Buffered(1)

    # Scoped-VMEM actually needed: double-buffered x/out blocks + resident
    # weight & bias (count 2x to be safe) + slack. Raising the limit keeps the
    # large-tile regime on v5e (16 MiB default scoped limit) while staying
    # within v7x's 64 MiB physical VMEM.
    need = 2 * tm * (h_dim * xb + zp * ob) + 2 * (h_dim + 1) * zp * wb
    vmem_limit = int(min(max(need + (4 << 20), 32 << 20), 64 << 20))

    cost = pl.CostEstimate(
        flops=2 * m * h_dim * zp,
        transcendentals=0,
        bytes_accessed=m * h_dim * xb + h_dim * zp * wb + m * zp * ob,
    )

    # Ragged last block is masked by Pallas: no host-side padding pass over x.
    grid = (pl.cdiv(m, tm),)

    out2d = pl.pallas_call(
        _linear_kernel,
        out_shape=jax.ShapeDtypeStruct((m, zp), x2d.dtype),
        grid=grid,
        in_specs=[
            # x: stream [TM, H] blocks down M (auto double-buffered).
            pl.BlockSpec((tm, h_dim), lambda i: (i, 0)),
            # weight / bias: same block every step -> VMEM resident.
            pl.BlockSpec((h_dim, zp), lambda i: (0, 0), **resident_kwargs),
            pl.BlockSpec((1, zp), lambda i: (0, 0), **resident_kwargs),
        ],
        out_specs=pl.BlockSpec((tm, zp), lambda i: (i, 0)),
        compiler_params=pltpu.CompilerParams(
            dimension_semantics=dim_sem,
            vmem_limit_bytes=vmem_limit,
        ),
        cost_estimate=cost,
    )(x2d, w_t, b2d)

    if out_dim != zp:
        # Stores inside the kernel are lane-dense (Zp padded to 128); slicing
        # the logical latent dim here is cheap relative to the x reads.
        out2d = out2d[:, :out_dim]
    return out2d


def _candidate_configs():
    cfgs = []
    core_par = getattr(pltpu, "CORE_PARALLEL", None)
    if core_par is not None:
        # v7x: split the M grid across the 2 TensorCores (no-op on 1-TC chips).
        cfgs.append(((core_par,), True))
        cfgs.append(((core_par,), False))
    cfgs.append((("parallel",), True))
    cfgs.append((("parallel",), False))
    return cfgs


def base_bottleneck_forward(h, w_t, b2d, *, out_dim=None, block_m=None):
    """Forward pass of BaseBottleneck: z = h @ W^T + b on the last dim.

    h:       (..., input_dim)     activations
    w_t:     (input_dim, z_pad)   pre-transposed nn.Linear weight (lane-padded)
    b2d:     (1, z_pad)           bias (lane-padded)
    out_dim: logical bottleneck_dim (<= z_pad); defaults to z_pad.
    """
    global _ACTIVE_CONFIG

    *lead, input_dim = h.shape
    zp = w_t.shape[1]
    if out_dim is None:
        out_dim = zp

    m = math.prod(lead) if lead else 1
    x2d = h.reshape(m, input_dim)
    tm = _pick_block_m(m, input_dim, zp, h.dtype, h.dtype, block_m)

    configs = [_ACTIVE_CONFIG] if _ACTIVE_CONFIG is not None else _candidate_configs()
    err = None
    out2d = None
    for dim_sem, single_w in configs:
        try:
            out2d = _forward_2d(
                x2d, w_t, b2d,
                tm=tm, out_dim=out_dim, dim_sem=dim_sem, single_buffer_w=single_w,
            )
            _ACTIVE_CONFIG = (dim_sem, single_w)
            err = None
            break
        except Exception as e:  # compile-time feature probe; retry plainer config
            err = e
    if err is not None:
        raise err
    return out2d.reshape(*lead, out_dim)


def init_linear_params(key, input_dim, bottleneck_dim, dtype=jnp.float32):
    """nn.Linear-style init in the kernel's canonical layout: weight
    pre-transposed to [H, Zp] and bias as [1, Zp], with Zp = bottleneck_dim
    rounded up to 128 lanes (zero-padded) so kernel output stores are
    lane-dense. Hoists the per-call transpose/pad out of the forward path."""
    k_w, k_b = jax.random.split(key)
    limit = 1.0 / math.sqrt(input_dim)
    weight = jax.random.uniform(
        k_w, (bottleneck_dim, input_dim), dtype, minval=-limit, maxval=limit
    )
    bias = jax.random.uniform(
        k_b, (bottleneck_dim,), dtype, minval=-limit, maxval=limit
    )
    zp = _round_up(bottleneck_dim, _LANE)
    w_t = jnp.zeros((input_dim, zp), dtype).at[:, :bottleneck_dim].set(weight.T)
    b2d = jnp.zeros((1, zp), dtype).at[0, :bottleneck_dim].set(bias)
    return w_t, b2d


if __name__ == "__main__":
    key = jax.random.PRNGKey(0)
    k_x, k_p, k_x2 = jax.random.split(key, 3)

    # --- Test 1: small b x s x h input (docstring shapes), f32, single block.
    batch, seq, hidden, latent = 2, 8, 32, 16
    h = jax.random.normal(k_x, (batch, seq, hidden), jnp.float32)
    w_t, b2d = init_linear_params(k_p, hidden, latent)

    z = jax.block_until_ready(base_bottleneck_forward(h, w_t, b2d, out_dim=latent))
    z_ref = h @ w_t[:, :latent] + b2d[0, :latent]
    assert z.shape == (batch, seq, latent)
    assert jnp.allclose(z, z_ref, atol=1e-5, rtol=1e-5)

    # --- Test 2: M not a multiple of the block -> ragged grid with a masked
    # last block (no host-side padding pass). block_m=64 over M=150 -> 3 steps.
    batch2, seq2 = 3, 50
    h2 = jax.random.normal(k_x2, (batch2, seq2, hidden), jnp.float32)
    z2 = jax.block_until_ready(
        base_bottleneck_forward(h2, w_t, b2d, out_dim=latent, block_m=64))
    z2_ref = h2 @ w_t[:, :latent] + b2d[0, :latent]
    assert z2.shape == (batch2, seq2, latent)
    assert jnp.allclose(z2, z2_ref, atol=1e-5, rtol=1e-5)

    # --- Test 3: bf16 I/O path (f32 accumulation inside the kernel), ragged M.
    z3 = jax.block_until_ready(
        base_bottleneck_forward(
            h2.astype(jnp.bfloat16), w_t.astype(jnp.bfloat16),
            b2d.astype(jnp.bfloat16), out_dim=latent, block_m=64))
    assert z3.dtype == jnp.bfloat16
    assert jnp.allclose(z3.astype(jnp.float32), z2_ref, atol=5e-2, rtol=5e-2)

    print("KERNEL_OK")
</pallas_src>

<mosaic_0001>
module attributes {stable_mosaic.version = 11 : i64} {
  func.func @_linear_kernel(%arg0: i32, %arg1: memref<16x32xf32, #tpu.memory_space<vmem>>, %arg2: memref<32x128xf32, #tpu.memory_space<vmem>>, %arg3: memref<1x128xf32, #tpu.memory_space<vmem>>, %arg4: memref<16x128xf32, #tpu.memory_space<vmem>>) attributes {dimension_semantics = [#tpu.dimension_semantics<core_parallel>], iteration_bounds = array<i64: 1>, scalar_prefetch = 0 : i64, scratch_operands = 0 : i64, tpu.core_type = #tpu.core_type<tc>, window_params = [{transform_indices = @transform_0, window_bounds = array<i64: 16, 32>}, {pipeline_mode = #tpu.pipeline_mode<synchronous>, transform_indices = @transform_1, window_bounds = array<i64: 32, 128>}, {pipeline_mode = #tpu.pipeline_mode<synchronous>, transform_indices = @transform_2, window_bounds = array<i64: 1, 128>}, {transform_indices = @transform_3, window_bounds = array<i64: 16, 128>}]} {
    %c0 = arith.constant 0 : index
    %c0_0 = arith.constant 0 : index
    %0 = vector.load %arg1[%c0, %c0_0] : memref<16x32xf32, #tpu.memory_space<vmem>>, vector<16x32xf32>
    %c0_1 = arith.constant 0 : index
    %c0_2 = arith.constant 0 : index
    %1 = vector.load %arg2[%c0_1, %c0_2] : memref<32x128xf32, #tpu.memory_space<vmem>>, vector<32x128xf32>
    %cst = arith.constant dense<0.000000e+00> : vector<16x128xf32>
    %2 = tpu.matmul %0, %1, %cst {dimension_numbers = #tpu.dot_dimension_numbers<[1], [0], [0], [1], [0, 0, 1, 1], [], []>} : vector<16x32xf32>, vector<32x128xf32>, vector<16x128xf32> -> vector<16x128xf32>
    %c0_3 = arith.constant 0 : index
    %c0_4 = arith.constant 0 : index
    %3 = vector.load %arg3[%c0_3, %c0_4] : memref<1x128xf32, #tpu.memory_space<vmem>>, vector<1x128xf32>
    %4 = vector.broadcast %3 : vector<1x128xf32> to vector<16x128xf32>
    %5 = arith.addf %2, %4 : vector<16x128xf32>
    %c0_5 = arith.constant 0 : index
    %c0_6 = arith.constant 0 : index
    %6 = vector.load %arg4[%c0_5, %c0_6] : memref<16x128xf32, #tpu.memory_space<vmem>>, vector<16x128xf32>
    tpu.vector_store %arg4[%c0_5, %c0_6], %5 {strides = array<i32>} : memref<16x128xf32, #tpu.memory_space<vmem>>, vector<16x128xf32>,
    return
  }
  func.func @transform_0(%arg0: i32) -> (i32, i32) {
    %c0_i32 = arith.constant 0 : i32
    %c0_i32_0 = arith.constant 0 : i32
    return %arg0, %c0_i32 : i32, i32
  }
  func.func @transform_1(%arg0: i32) -> (i32, i32) {
    %c0_i32 = arith.constant 0 : i32
    %c0_i32_0 = arith.constant 0 : i32
    %c0_i32_1 = arith.constant 0 : i32
    return %c0_i32, %c0_i32_0 : i32, i32
  }
  func.func @transform_2(%arg0: i32) -> (i32, i32) {
    %c0_i32 = arith.constant 0 : i32
    %c0_i32_0 = arith.constant 0 : i32
    %c0_i32_1 = arith.constant 0 : i32
    return %c0_i32, %c0_i32_0 : i32, i32
  }
  func.func @transform_3(%arg0: i32) -> (i32, i32) {
    %c0_i32 = arith.constant 0 : i32
    %c0_i32_0 = arith.constant 0 : i32
    return %arg0, %c0_i32 : i32, i32
  }
}

module attributes {stable_mosaic.version = 11 : i64} {
  func.func @_linear_kernel(%arg0: i32, %arg1: memref<16x32xf32, #tpu.memory_space<vmem>>, %arg2: memref<32x128xf32, #tpu.memory_space<vmem>>, %arg3: memref<1x128xf32, #tpu.memory_space<vmem>>, %arg4: memref<16x128xf32, #tpu.memory_space<vmem>>) attributes {dimension_semantics = [#tpu.dimension_semantics<core_parallel>], iteration_bounds = array<i64: 1>, scalar_prefetch = 0 : i64, scratch_operands = 0 : i64, tpu.core_type = #tpu.core_type<tc>, window_params = [{transform_indices = @transform_0, window_bounds = array<i64: 16, 32>}, {pipeline_mode = #tpu.pipeline_mode<synchronous>, transform_indices = @transform_1, window_bounds = array<i64: 32, 128>}, {pipeline_mode = #tpu.pipeline_mode<synchronous>, transform_indices = @transform_2, window_bounds = array<i64: 1, 128>}, {transform_indices = @transform_3, window_bounds = array<i64: 16, 128>}]} {
    %c0 = arith.constant 0 : index
    %c0_0 = arith.constant 0 : index
    %0 = vector.load %arg1[%c0, %c0_0] : memref<16x32xf32, #tpu.memory_space<vmem>>, vector<16x32xf32>
    %c0_1 = arith.constant 0 : index
    %c0_2 = arith.constant 0 : index
    %1 = vector.load %arg2[%c0_1, %c0_2] : memref<32x128xf32, #tpu.memory_space<vmem>>, vector<32x128xf32>
    %cst = arith.constant dense<0.000000e+00> : vector<16x128xf32>
    %2 = tpu.matmul %0, %1, %cst {dimension_numbers = #tpu.dot_dimension_numbers<[1], [0], [0], [1], [0, 0, 1, 1], [], []>} : vector<16x32xf32>, vector<32x128xf32>, vector<16x128xf32> -> vector<16x128xf32>
    %c0_3 = arith.constant 0 : index
    %c0_4 = arith.constant 0 : index
    %3 = vector.load %arg3[%c0_3, %c0_4] : memref<1x128xf32, #tpu.memory_space<vmem>>, vector<1x128xf32>
    %4 = vector.broadcast %3 : vector<1x128xf32> to vector<16x128xf32>
    %5 = arith.addf %2, %4 : vector<16x128xf32>
    %c0_5 = arith.constant 0 : index
    %c0_6 = arith.constant 0 : index
    %6 = vector.load %arg4[%c0_5, %c0_6] : memref<16x128xf32, #tpu.memory_space<vmem>>, vector<16x128xf32>
    tpu.vector_store %arg4[%c0_5, %c0_6], %5 {strides = array<i32>} : memref<16x128xf32, #tpu.memory_space<vmem>>, vector<16x128xf32>,
    return
  }
  func.func @transform_0(%arg0: i32) -> (i32, i32) {
    %c0_i32 = arith.constant 0 : i32
    %c0_i32_0 = arith.constant 0 : i32
    return %arg0, %c0_i32 : i32, i32
  }
  func.func @transform_1(%arg0: i32) -> (i32, i32) {
    %c0_i32 = arith.constant 0 : i32
    %c0_i32_0 = arith.constant 0 : i32
    %c0_i32_1 = arith.constant 0 : i32
    return %c0_i32, %c0_i32_0 : i32, i32
  }
  func.func @transform_2(%arg0: i32) -> (i32, i32) {
    %c0_i32 = arith.constant 0 : i32
    %c0_i32_0 = arith.constant 0 : i32
    %c0_i32_1 = arith.constant 0 : i32
    return %c0_i32, %c0_i32_0 : i32, i32
  }
  func.func @transform_3(%arg0: i32) -> (i32, i32) {
    %c0_i32 = arith.constant 0 : i32
    %c0_i32_0 = arith.constant 0 : i32
    return %arg0, %c0_i32 : i32, i32
  }
}

module attributes {stable_mosaic.version = 11 : i64} {
  func.func @_linear_kernel(%arg0: i32, %arg1: memref<16x32xf32, #tpu.memory_space<vmem>>, %arg2: memref<32x128xf32, #tpu.memory_space<vmem>>, %arg3: memref<1x128xf32, #tpu.memory_space<vmem>>, %arg4: memref<16x128xf32, #tpu.memory_space<vmem>>) attributes {dimension_semantics = [#tpu.dimension_semantics<parallel>], iteration_bounds = array<i64: 1>, scalar_prefetch = 0 : i64, scratch_operands = 0 : i64, tpu.core_type = #tpu.core_type<tc>, window_params = [{transform_indices = @transform_0, window_bounds = array<i64: 16, 32>}, {pipeline_mode = #tpu.pipeline_mode<synchronous>, transform_indices = @transform_1, window_bounds = array<i64: 32, 128>}, {pipeline_mode = #tpu.pipeline_mode<synchronous>, transform_indices = @transform_2, window_bounds = array<i64: 1, 128>}, {transform_indices = @transform_3, window_bounds = array<i64: 16, 128>}]} {
    %c0 = arith.constant 0 : index
    %c0_0 = arith.constant 0 : index
    %0 = vector.load %arg1[%c0, %c0_0] : memref<16x32xf32, #tpu.memory_space<vmem>>, vector<16x32xf32>
    %c0_1 = arith.constant 0 : index
    %c0_2 = arith.constant 0 : index
    %1 = vector.load %arg2[%c0_1, %c0_2] : memref<32x128xf32, #tpu.memory_space<vmem>>, vector<32x128xf32>
    %cst = arith.constant dense<0.000000e+00> : vector<16x128xf32>
    %2 = tpu.matmul %0, %1, %cst {dimension_numbers = #tpu.dot_dimension_numbers<[1], [0], [0], [1], [0, 0, 1, 1], [], []>} : vector<16x32xf32>, vector<32x128xf32>, vector<16x128xf32> -> vector<16x128xf32>
    %c0_3 = arith.constant 0 : index
    %c0_4 = arith.constant 0 : index
    %3 = vector.load %arg3[%c0_3, %c0_4] : memref<1x128xf32, #tpu.memory_space<vmem>>, vector<1x128xf32>
    %4 = vector.broadcast %3 : vector<1x128xf32> to vector<16x128xf32>
    %5 = arith.addf %2, %4 : vector<16x128xf32>
    %c0_5 = arith.constant 0 : index
    %c0_6 = arith.constant 0 : index
    %6 = vector.load %arg4[%c0_5, %c0_6] : memref<16x128xf32, #tpu.memory_space<vmem>>, vector<16x128xf32>
    tpu.vector_store %arg4[%c0_5, %c0_6], %5 {strides = array<i32>} : memref<16x128xf32, #tpu.memory_space<vmem>>, vector<16x128xf32>,
    return
  }
  func.func @transform_0(%arg0: i32) -> (i32, i32) {
    %c0_i32 = arith.constant 0 : i32
    %c0_i32_0 = arith.constant 0 : i32
    return %arg0, %c0_i32 : i32, i32
  }
  func.func @transform_1(%arg0: i32) -> (i32, i32) {
    %c0_i32 = arith.constant 0 : i32
    %c0_i32_0 = arith.constant 0 : i32
    %c0_i32_1 = arith.constant 0 : i32
    return %c0_i32, %c0_i32_0 : i32, i32
  }
  func.func @transform_2(%arg0: i32) -> (i32, i32) {
    %c0_i32 = arith.constant 0 : i32
    %c0_i32_0 = arith.constant 0 : i32
    %c0_i32_1 = arith.constant 0 : i32
    return %c0_i32, %c0_i32_0 : i32, i32
  }
  func.func @transform_3(%arg0: i32) -> (i32, i32) {
    %c0_i32 = arith.constant 0 : i32
    %c0_i32_0 = arith.constant 0 : i32
    return %arg0, %c0_i32 : i32, i32
  }
}

module attributes {stable_mosaic.version = 11 : i64} {
  func.func @_linear_kernel(%arg0: i32, %arg1: memref<16x32xf32, #tpu.memory_space<vmem>>, %arg2: memref<32x128xf32, #tpu.memory_space<vmem>>, %arg3: memref<1x128xf32, #tpu.memory_space<vmem>>, %arg4: memref<16x128xf32, #tpu.memory_space<vmem>>) attributes {dimension_semantics = [#tpu.dimension_semantics<parallel>], iteration_bounds = array<i64: 1>, scalar_prefetch = 0 : i64, scratch_operands = 0 : i64, tpu.core_type = #tpu.core_type<tc>, window_params = [{transform_indices = @transform_0, window_bounds = array<i64: 16, 32>}, {pipeline_mode = #tpu.pipeline_mode<synchronous>, transform_indices = @transform_1, window_bounds = array<i64: 32, 128>}, {pipeline_mode = #tpu.pipeline_mode<synchronous>, transform_indices = @transform_2, window_bounds = array<i64: 1, 128>}, {transform_indices = @transform_3, window_bounds = array<i64: 16, 128>}]} {
    %c0 = arith.constant 0 : index
    %c0_0 = arith.constant 0 : index
    %0 = vector.load %arg1[%c0, %c0_0] : memref<16x32xf32, #tpu.memory_space<vmem>>, vector<16x32xf32>
    %c0_1 = arith.constant 0 : index
    %c0_2 = arith.constant 0 : index
    %1 = vector.load %arg2[%c0_1, %c0_2] : memref<32x128xf32, #tpu.memory_space<vmem>>, vector<32x128xf32>
    %cst = arith.constant dense<0.000000e+00> : vector<16x128xf32>
    %2 = tpu.matmul %0, %1, %cst {dimension_numbers = #tpu.dot_dimension_numbers<[1], [0], [0], [1], [0, 0, 1, 1], [], []>} : vector<16x32xf32>, vector<32x128xf32>, vector<16x128xf32> -> vector<16x128xf32>
    %c0_3 = arith.constant 0 : index
    %c0_4 = arith.constant 0 : index
    %3 = vector.load %arg3[%c0_3, %c0_4] : memref<1x128xf32, #tpu.memory_space<vmem>>, vector<1x128xf32>
    %4 = vector.broadcast %3 : vector<1x128xf32> to vector<16x128xf32>
    %5 = arith.addf %2, %4 : vector<16x128xf32>
    %c0_5 = arith.constant 0 : index
    %c0_6 = arith.constant 0 : index
    %6 = vector.load %arg4[%c0_5, %c0_6] : memref<16x128xf32, #tpu.memory_space<vmem>>, vector<16x128xf32>
    tpu.vector_store %arg4[%c0_5, %c0_6], %5 {strides = array<i32>} : memref<16x128xf32, #tpu.memory_space<vmem>>, vector<16x128xf32>,
    return
  }
  func.func @transform_0(%arg0: i32) -> (i32, i32) {
    %c0_i32 = arith.constant 0 : i32
    %c0_i32_0 = arith.constant 0 : i32
    return %arg0, %c0_i32 : i32, i32
  }
  func.func @transform_1(%arg0: i32) -> (i32, i32) {
    %c0_i32 = arith.constant 0 : i32
    %c0_i32_0 = arith.constant 0 : i32
    %c0_i32_1 = arith.constant 0 : i32
    return %c0_i32, %c0_i32_0 : i32, i32
  }
  func.func @transform_2(%arg0: i32) -> (i32, i32) {
    %c0_i32 = arith.constant 0 : i32
    %c0_i32_0 = arith.constant 0 : i32
    %c0_i32_1 = arith.constant 0 : i32
    return %c0_i32, %c0_i32_0 : i32, i32
  }
  func.func @transform_3(%arg0: i32) -> (i32, i32) {
    %c0_i32 = arith.constant 0 : i32
    %c0_i32_0 = arith.constant 0 : i32
    return %arg0, %c0_i32 : i32, i32
  }
}

</mosaic_0001>

<llo_original>
// kernel: _forward_2d.1
$region0: #{_forward_2d.1}
  #allocation0 [shape = 'u32[]', space=smem, size = 0x4, offset = 0x4, fixed_abs, tag = 'smem constant byte address 0x4 - core index']
  #allocation1 [shape = 'u32[144,128]{1,0:T(1,128)}', space=vmem, size = 0x12000, scoped, tag = 'internal scratch']
  %s0 = inlined_call_operand.hbm [shape: f32[16,32], index: 0, kind: input, shape index: {}]
  %s1 = inlined_call_operand.hbm [shape: f32[32,128], index: 1, kind: input, shape index: {}]
  %s2 = inlined_call_operand.vmem [shape: f32[1,128], index: 2, kind: input, shape index: {}]
  %s3 = inlined_call_operand.hbm [shape: f32[16,128], index: 3, kind: output, shape index: {}]
  %s4 = sld [smem:[#allocation0]]
  $region30: #{_forward_2d.1} parent=0
    _
  %s6 = ssub.s32 1, %s4
  %s7 = scalar_select 0, %s6, %s4
  $region1: #{_forward_2d.1} parent=0
    #allocation2 [shape = 'u8[8192]{0}', space=vmem, size = 0x2000, scoped, tag = 'input window, operand 0, single buffered']
    #allocation3 [shape = 's32[1]{0}', space=sflag, size = 0x4, scoped, tag = 'scoped memory for _forward_2d.1']
    #allocation4 [shape = 's32[1]{0}', space=sflag, size = 0x4, scoped, tag = 'scoped memory for _forward_2d.1']
    #allocation5 [shape = 'u8[16384]{0}', space=vmem, size = 0x4000, scoped, tag = 'input window, operand 1, single buffered']
    #allocation6 [shape = 's32[1]{0}', space=sflag, size = 0x4, scoped, tag = 'scoped memory for _forward_2d.1']
    #allocation7 [shape = 'u8[8192]{0}', space=vmem, size = 0x2000, scoped, tag = 'output window, operand 0, single buffered']
    %8 = vsyncpa [#allocation3], 0
    %9 = vsyncpa [#allocation6], 0
    %10 = vsyncpa [#allocation4], 0
    // Predicated region
    $region2: #{_forward_2d.1} parent=1 // pred_check
      _
    $region3: #{_forward_2d.1} parent=1 // pred_check_branch
      %12 = sbr.rel (0) target = $region5
    $region4: #{_forward_2d.1} parent=1 // pred_region
      %s13 = smul.u32 2, %s7
      %s15 = ssub.s32 256, 256
      %16 = vsyncadd [#allocation3], %s15
      %s17 = smul.addr %s13, 128
      %s18 = scalar_lea.hbm %s0, %s17
      %s19 = sshll.u32 [#allocation2], 4
      %s20 = int_to_ptr.vmem [resolvable:$true] %s19
      %25 = dma.hbm_to_vmem [thread:$0]  %s18, 256, %s20, [#allocation3], 128, 128, 8
    $region5: #{_forward_2d.1} parent=1 // pred_fallthru
      _
    // Predicated region
    $region6: #{_forward_2d.1} parent=1 // pred_check
      _
    $region7: #{_forward_2d.1} parent=1 // pred_check_branch
      %27 = sbr.rel (0) target = $region9
    $region8: #{_forward_2d.1} parent=1 // pred_region
      %s29 = ssub.s32 512, 512
      %30 = vsyncadd [#allocation6], %s29
      %s31 = sshll.u32 [#allocation5], 4
      %s32 = int_to_ptr.vmem [resolvable:$true] %s31
      %37 = dma.hbm_to_vmem [thread:$0]  %s1, 512, %s32, [#allocation6], 128, 128, 8
    $region9: #{_forward_2d.1} parent=1 // pred_fallthru
      _
    // Predicated region
    $region10: #{_forward_2d.1} parent=1 // pred_check
      _
    $region11: #{_forward_2d.1} parent=1 // pred_check_branch
      %39 = sbr.rel (0) target = $region13
    $region12: #{_forward_2d.1} parent=1 // pred_region
      _
    $region13: #{_forward_2d.1} parent=1 // pred_fallthru
      _
    // Predicated region
    $region14: #{_forward_2d.1} parent=1 // pred_check
      _
    $region15: #{_forward_2d.1} parent=1 // pred_check_branch
      %41 = sbr.rel (0) target = $region17
    $region16: #{_forward_2d.1} parent=1 // pred_region
      %42 = dma.done [#allocation3], 256
    $region17: #{_forward_2d.1} parent=1 // pred_fallthru
      _
    // Predicated region
    $region18: #{_forward_2d.1} parent=1 // pred_check
      _
    $region19: #{_forward_2d.1} parent=1 // pred_check_branch
      %44 = sbr.rel (0) target = $region21
    $region20: #{_forward_2d.1} parent=1 // pred_region
      %45 = dma.done [#allocation6], 512
    $region21: #{_forward_2d.1} parent=1 // pred_fallthru
      _
    %s46 = smul.u32 2, %s7
    %s47 = smul.u32 2, %s7
    %v48 = vld [vmem:[#allocation2] sm:$0xff]
    %v49 = vld [vmem:[#allocation2 + $0x8] sm:$0xff]
    %v50 = vld [vmem:[#allocation5] sm:$0xff]
    %v51 = vld [vmem:[#allocation5 + $0x8] sm:$0xff]
    %v52 = vld [vmem:[#allocation5 + $0x10] sm:$0xff]
    %v53 = vld [vmem:[#allocation5 + $0x18] sm:$0xff]
    %v54 = vld [vmem:[%s2] sm:$0x1]
    %v56 = vlaneseq
    %v57 = vshrl.u32 %v56, 7
    %v58 = vsub.s32 0, %v57
    %v59 = vrot.slane %v54, %v58
    %vm61 = vcmask 261120
    %v63 = vsel %vm61, %v48, 0
    %v66 = vsel %vm61, %v49, 0
    %68 = vmatprep.subr.mxu0 0.0
    %69 = vmatpush1.msra.mxu0 %v50
    %70 = vmatprep.subr.mxu0 0.0
    %71 = vmatpush1.msra.mxu0 %v51
    %72 = vmatprep.subr.mxu0 0.0
    %73 = vmatpush1.msra.mxu0 %v52
    %74 = vmatprep.subr.mxu0 0.0
    %75 = vmatpush1.msra.mxu0 %v53
    %76 = vmatprep.subr.mxu0 0.0
    %77 = vmatpush1.msra.mxu0 0.0
    %78 = vmatprep.subr.mxu0 0.0
    %79 = vmatpush1.msra.mxu0 0.0
    %80 = vmatprep.subr.mxu0 0.0
    %81 = vmatpush1.msra.mxu0 0.0
    %82 = vmatprep.subr.mxu0 0.0
    %83 = vmatpush1.msra.mxu0 0.0
    %84 = vmatprep.subr.mxu0 0.0
    %85 = vmatpush1.msra.mxu0 0.0
    %86 = vmatprep.subr.mxu0 0.0
    %87 = vmatpush1.msra.mxu0 0.0
    %88 = vmatprep.subr.mxu0 0.0
    %89 = vmatpush1.msra.mxu0 0.0
    %90 = vmatprep.subr.mxu0 0.0
    %91 = vmatpush1.msra.mxu0 0.0
    %92 = vmatprep.subr.mxu0 0.0
    %93 = vmatpush1.msra.mxu0 0.0
    %94 = vmatprep.subr.mxu0 0.0
    %95 = vmatpush1.msra.mxu0 0.0
    %96 = vmatprep.subr.mxu0 0.0
    %97 = vmatpush1.msra.mxu0 0.0
    %98 = vmatprep.subr.mxu0 0.0
    %99 = vmatpush1.msra.mxu0 0.0
    %100 = vmatprep.subr.mxu0 0.0
    %101 = vmatpush1.msra.mxu0 0.0
    %102 = vmatprep.subr.mxu0 0.0
    %103 = vmatpush1.msra.mxu0 0.0
    %104 = vmatprep.subr.mxu0 0.0
    %105 = vmatpush1.msra.mxu0 0.0
    %106 = vmatprep.subr.mxu0 0.0
    %107 = vmatpush1.msra.mxu0 0.0
    %108 = vmatprep.subr.mxu0 0.0
    %109 = vmatpush1.msra.mxu0 0.0
    %110 = vmatprep.subr.mxu0 0.0
    %111 = vmatpush1.msra.mxu0 0.0
    %112 = vmatprep.subr.mxu0 0.0
    %113 = vmatpush1.msra.mxu0 0.0
    %114 = vmatprep.subr.mxu0 0.0
    %115 = vmatpush1.msra.mxu0 0.0
    %116 = vmatprep.subr.mxu0 0.0
    %117 = vmatpush1.msra.mxu0 0.0
    %118 = vmatprep.subr.mxu0 0.0
    %119 = vmatpush1.msra.mxu0 0.0
    %120 = vmatprep.subr.mxu0 0.0
    %121 = vmatpush1.msra.mxu0 0.0
    %122 = vmatprep.subr.mxu0 0.0
    %123 = vmatpush1.msra.mxu0 0.0
    %124 = vmatprep.subr.mxu0 0.0
    %125 = vmatpush1.msra.mxu0 0.0
    %126 = vmatprep.subr.mxu0 0.0
    %127 = vmatpush1.msra.mxu0 0.0
    %128 = vmatprep.subr.mxu0 0.0
    %129 = vmatpush1.msra.mxu0 0.0
    %130 = vmatprep.subr.mxu0 0.0
    %131 = vmatpush1.msra.mxu0 0.0
    %132 = vmatprep.mubr.f32.mxu0 0.0
    %133 = vmatmul.mubr.f32.gmra.mrb[0].mxu0 %v63
    %v134 = vpop.f32.mrb[0].mxu0
    %v135 = vadd.f32 %v59, %v134
    %v136 = vpop.f32.mrb[0].mxu0
    %137 = vmatprep.mubr.f32.mxu0 0.0
    %138 = vmatmul.mubr.f32.gmra.mrb[0].mxu0 %v66
    %v139 = vpop.f32.mrb[0].mxu0
    %v140 = vadd.f32 %v59, %v139
    %v141 = vpop.f32.mrb[0].mxu0
    %142 = vdwg.mxu0
    %143 = vst [vmem:[#allocation7] sm:$0xff] %v135
    %144 = vst [vmem:[#allocation7 + $0x8] sm:$0xff] %v140
    // Predicated region
    $region22: #{_forward_2d.1} parent=1 // pred_check
      _
    $region23: #{_forward_2d.1} parent=1 // pred_check_branch
      %146 = sbr.rel (0) target = $region25
    $region24: #{_forward_2d.1} parent=1 // pred_region
      %s147 = smul.u32 2, %s7
      %s149 = ssub.s32 256, 256
      %150 = vsyncadd [#allocation4], %s149
      %s151 = smul.addr %s147, 128
      %s152 = scalar_lea.hbm %s3, %s151
      %s153 = sshll.u32 [#allocation7], 4
      %s154 = int_to_ptr.vmem [resolvable:$true] %s153
      %159 = dma.vmem_to_hbm [thread:$0]  %s154, 256, %s152, [#allocation4], 128, 128, 8
    $region25: #{_forward_2d.1} parent=1 // pred_fallthru
      _
    // Predicated region
    $region26: #{_forward_2d.1} parent=1 // pred_check
      _
    $region27: #{_forward_2d.1} parent=1 // pred_check_branch
      %161 = sbr.rel (0) target = $region29
    $region28: #{_forward_2d.1} parent=1 // pred_region
      %162 = dma.done [#allocation4], 256
    $region29: #{_forward_2d.1} parent=1 // pred_fallthru
      _
    %163 = vsyncpa [#allocation3], 1
    %164 = vsyncpa [#allocation6], 1
    %165 = vsyncpa [#allocation4], 1

// kernel: _forward_2d.1
$region0: #{_forward_2d.1}
  #allocation0 [shape = 'u32[]', space=smem, size = 0x4, offset = 0x4, fixed_abs, tag = 'smem constant byte address 0x4 - core index']
  #allocation1 [shape = 'u32[144,128]{1,0:T(1,128)}', space=vmem, size = 0x12000, scoped, tag = 'internal scratch']
  %s0 = inlined_call_operand.hbm [shape: f32[16,32], index: 0, kind: input, shape index: {}]
  %s1 = inlined_call_operand.hbm [shape: f32[32,128], index: 1, kind: input, shape index: {}]
  %s2 = inlined_call_operand.vmem [shape: f32[1,128], index: 2, kind: input, shape index: {}]
  %s3 = inlined_call_operand.hbm [shape: f32[16,128], index: 3, kind: output, shape index: {}]
  %s4 = sld [smem:[#allocation0]]
  $region30: #{_forward_2d.1} parent=0
    _
  %s6 = ssub.s32 1, %s4
  %s7 = scalar_select 0, %s6, %s4
  $region1: #{_forward_2d.1} parent=0
    #allocation2 [shape = 'u8[8192]{0}', space=vmem, size = 0x2000, scoped, tag = 'input window, operand 0, single buffered']
    #allocation3 [shape = 's32[1]{0}', space=sflag, size = 0x4, scoped, tag = 'scoped memory for _forward_2d.1']
    #allocation4 [shape = 's32[1]{0}', space=sflag, size = 0x4, scoped, tag = 'scoped memory for _forward_2d.1']
    #allocation5 [shape = 'u8[16384]{0}', space=vmem, size = 0x4000, scoped, tag = 'input window, operand 1, single buffered']
    #allocation6 [shape = 's32[1]{0}', space=sflag, size = 0x4, scoped, tag = 'scoped memory for _forward_2d.1']
    #allocation7 [shape = 'u8[8192]{0}', space=vmem, size = 0x2000, scoped, tag = 'output window, operand 0, single buffered']
    %8 = vsyncpa [#allocation3], 0
    %9 = vsyncpa [#allocation6], 0
    %10 = vsyncpa [#allocation4], 0
    // Predicated region
    $region2: #{_forward_2d.1} parent=1 // pred_check
      _
    $region3: #{_forward_2d.1} parent=1 // pred_check_branch
      %12 = sbr.rel (0) target = $region5
    $region4: #{_forward_2d.1} parent=1 // pred_region
      %s13 = smul.u32 2, %s7
      %s15 = ssub.s32 256, 256
      %16 = vsyncadd [#allocation3], %s15
      %s17 = smul.addr %s13, 128
      %s18 = scalar_lea.hbm %s0, %s17
      %s19 = sshll.u32 [#allocation2], 4
      %s20 = int_to_ptr.vmem [resolvable:$true] %s19
      %25 = dma.hbm_to_vmem [thread:$0]  %s18, 256, %s20, [#allocation3], 128, 128, 8
    $region5: #{_forward_2d.1} parent=1 // pred_fallthru
      _
    // Predicated region
    $region6: #{_forward_2d.1} parent=1 // pred_check
      _
    $region7: #{_forward_2d.1} parent=1 // pred_check_branch
      %27 = sbr.rel (0) target = $region9
    $region8: #{_forward_2d.1} parent=1 // pred_region
      %s29 = ssub.s32 512, 512
      %30 = vsyncadd [#allocation6], %s29
      %s31 = sshll.u32 [#allocation5], 4
      %s32 = int_to_ptr.vmem [resolvable:$true] %s31
      %37 = dma.hbm_to_vmem [thread:$0]  %s1, 512, %s32, [#allocation6], 128, 128, 8
    $region9: #{_forward_2d.1} parent=1 // pred_fallthru
      _
    // Predicated region
    $region10: #{_forward_2d.1} parent=1 // pred_check
      _
    $region11: #{_forward_2d.1} parent=1 // pred_check_branch
      %39 = sbr.rel (0) target = $region13
    $region12: #{_forward_2d.1} parent=1 // pred_region
      _
    $region13: #{_forward_2d.1} parent=1 // pred_fallthru
      _
    // Predicated region
    $region14: #{_forward_2d.1} parent=1 // pred_check
      _
    $region15: #{_forward_2d.1} parent=1 // pred_check_branch
      %41 = sbr.rel (0) target = $region17
    $region16: #{_forward_2d.1} parent=1 // pred_region
      %42 = dma.done [#allocation3], 256
    $region17: #{_forward_2d.1} parent=1 // pred_fallthru
      _
    // Predicated region
    $region18: #{_forward_2d.1} parent=1 // pred_check
      _
    $region19: #{_forward_2d.1} parent=1 // pred_check_branch
      %44 = sbr.rel (0) target = $region21
    $region20: #{_forward_2d.1} parent=1 // pred_region
      %45 = dma.done [#allocation6], 512
    $region21: #{_forward_2d.1} parent=1 // pred_fallthru
      _
    %s46 = smul.u32 2, %s7
    %s47 = smul.u32 2, %s7
    %v48 = vld [vmem:[#allocation2] sm:$0xff]
    %v49 = vld [vmem:[#allocation2 + $0x8] sm:$0xff]
    %v50 = vld [vmem:[#allocation5] sm:$0xff]
    %v51 = vld [vmem:[#allocation5 + $0x8] sm:$0xff]
    %v52 = vld [vmem:[#allocation5 + $0x10] sm:$0xff]
    %v53 = vld [vmem:[#allocation5 + $0x18] sm:$0xff]
    %v54 = vld [vmem:[%s2] sm:$0x1]
    %v56 = vlaneseq
    %v57 = vshrl.u32 %v56, 7
    %v58 = vsub.s32 0, %v57
    %v59 = vrot.slane %v54, %v58
    %vm61 = vcmask 261120
    %v63 = vsel %vm61, %v48, 0
    %v66 = vsel %vm61, %v49, 0
    %68 = vmatprep.subr.mxu0 0.0
    %69 = vmatpush1.msra.mxu0 %v50
    %70 = vmatprep.subr.mxu0 0.0
    %71 = vmatpush1.msra.mxu0 %v51
    %72 = vmatprep.subr.mxu0 0.0
    %73 = vmatpush1.msra.mxu0 %v52
    %74 = vmatprep.subr.mxu0 0.0
    %75 = vmatpush1.msra.mxu0 %v53
    %76 = vmatprep.subr.mxu0 0.0
    %77 = vmatpush1.msra.mxu0 0.0
    %78 = vmatprep.subr.mxu0 0.0
    %79 = vmatpush1.msra.mxu0 0.0
    %80 = vmatprep.subr.mxu0 0.0
    %81 = vmatpush1.msra.mxu0 0.0
    %82 = vmatprep.subr.mxu0 0.0
    %83 = vmatpush1.msra.mxu0 0.0
    %84 = vmatprep.subr.mxu0 0.0
    %85 = vmatpush1.msra.mxu0 0.0
    %86 = vmatprep.subr.mxu0 0.0
    %87 = vmatpush1.msra.mxu0 0.0
    %88 = vmatprep.subr.mxu0 0.0
    %89 = vmatpush1.msra.mxu0 0.0
    %90 = vmatprep.subr.mxu0 0.0
    %91 = vmatpush1.msra.mxu0 0.0
    %92 = vmatprep.subr.mxu0 0.0
    %93 = vmatpush1.msra.mxu0 0.0
    %94 = vmatprep.subr.mxu0 0.0
    %95 = vmatpush1.msra.mxu0 0.0
    %96 = vmatprep.subr.mxu0 0.0
    %97 = vmatpush1.msra.mxu0 0.0
    %98 = vmatprep.subr.mxu0 0.0
    %99 = vmatpush1.msra.mxu0 0.0
    %100 = vmatprep.subr.mxu0 0.0
    %101 = vmatpush1.msra.mxu0 0.0
    %102 = vmatprep.subr.mxu0 0.0
    %103 = vmatpush1.msra.mxu0 0.0
    %104 = vmatprep.subr.mxu0 0.0
    %105 = vmatpush1.msra.mxu0 0.0
    %106 = vmatprep.subr.mxu0 0.0
    %107 = vmatpush1.msra.mxu0 0.0
    %108 = vmatprep.subr.mxu0 0.0
    %109 = vmatpush1.msra.mxu0 0.0
    %110 = vmatprep.subr.mxu0 0.0
    %111 = vmatpush1.msra.mxu0 0.0
    %112 = vmatprep.subr.mxu0 0.0
    %113 = vmatpush1.msra.mxu0 0.0
    %114 = vmatprep.subr.mxu0 0.0
    %115 = vmatpush1.msra.mxu0 0.0
    %116 = vmatprep.subr.mxu0 0.0
    %117 = vmatpush1.msra.mxu0 0.0
    %118 = vmatprep.subr.mxu0 0.0
    %119 = vmatpush1.msra.mxu0 0.0
    %120 = vmatprep.subr.mxu0 0.0
    %121 = vmatpush1.msra.mxu0 0.0
    %122 = vmatprep.subr.mxu0 0.0
    %123 = vmatpush1.msra.mxu0 0.0
    %124 = vmatprep.subr.mxu0 0.0
    %125 = vmatpush1.msra.mxu0 0.0
    %126 = vmatprep.subr.mxu0 0.0
    %127 = vmatpush1.msra.mxu0 0.0
    %128 = vmatprep.subr.mxu0 0.0
    %129 = vmatpush1.msra.mxu0 0.0
    %130 = vmatprep.subr.mxu0 0.0
    %131 = vmatpush1.msra.mxu0 0.0
    %132 = vmatprep.mubr.f32.mxu0 0.0
    %133 = vmatmul.mubr.f32.gmra.mrb[0].mxu0 %v63
    %v134 = vpop.f32.mrb[0].mxu0
    %v135 = vadd.f32 %v59, %v134
    %v136 = vpop.f32.mrb[0].mxu0
    %137 = vmatprep.mubr.f32.mxu0 0.0
    %138 = vmatmul.mubr.f32.gmra.mrb[0].mxu0 %v66
    %v139 = vpop.f32.mrb[0].mxu0
    %v140 = vadd.f32 %v59, %v139
    %v141 = vpop.f32.mrb[0].mxu0
    %142 = vdwg.mxu0
    %143 = vst [vmem:[#allocation7] sm:$0xff] %v135
    %144 = vst [vmem:[#allocation7 + $0x8] sm:$0xff] %v140
    // Predicated region
    $region22: #{_forward_2d.1} parent=1 // pred_check
      _
    $region23: #{_forward_2d.1} parent=1 // pred_check_branch
      %146 = sbr.rel (0) target = $region25
    $region24: #{_forward_2d.1} parent=1 // pred_region
      %s147 = smul.u32 2, %s7
      %s149 = ssub.s32 256, 256
      %150 = vsyncadd [#allocation4], %s149
      %s151 = smul.addr %s147, 128
      %s152 = scalar_lea.hbm %s3, %s151
      %s153 = sshll.u32 [#allocation7], 4
      %s154 = int_to_ptr.vmem [resolvable:$true] %s153
      %159 = dma.vmem_to_hbm [thread:$0]  %s154, 256, %s152, [#allocation4], 128, 128, 8
    $region25: #{_forward_2d.1} parent=1 // pred_fallthru
      _
    // Predicated region
    $region26: #{_forward_2d.1} parent=1 // pred_check
      _
    $region27: #{_forward_2d.1} parent=1 // pred_check_branch
      %161 = sbr.rel (0) target = $region29
    $region28: #{_forward_2d.1} parent=1 // pred_region
      %162 = dma.done [#allocation4], 256
    $region29: #{_forward_2d.1} parent=1 // pred_fallthru
      _
    %163 = vsyncpa [#allocation3], 1
    %164 = vsyncpa [#allocation6], 1
    %165 = vsyncpa [#allocation4], 1

// kernel: _forward_2d.1
$region0: #{_forward_2d.1}
  #allocation0 [shape = 'u32[]', space=smem, size = 0x4, offset = 0x4, fixed_abs, tag = 'smem constant byte address 0x4 - core index']
  #allocation1 [shape = 'u32[144,128]{1,0:T(1,128)}', space=vmem, size = 0x12000, scoped, tag = 'internal scratch']
  %s0 = inlined_call_operand.hbm [shape: f32[16,32], index: 0, kind: input, shape index: {}]
  %s1 = inlined_call_operand.hbm [shape: f32[32,128], index: 1, kind: input, shape index: {}]
  %s2 = inlined_call_operand.vmem [shape: f32[1,128], index: 2, kind: input, shape index: {}]
  %s3 = inlined_call_operand.hbm [shape: f32[16,128], index: 3, kind: output, shape index: {}]
  %s4 = sld [smem:[#allocation0]]
  $region30: #{_forward_2d.1} parent=0
    _
  %s6 = ssub.s32 1, %s4
  %s7 = scalar_select 0, %s6, %s4
  $region1: #{_forward_2d.1} parent=0
    #allocation2 [shape = 'u8[8192]{0}', space=vmem, size = 0x2000, scoped, tag = 'input window, operand 0, single buffered']
    #allocation3 [shape = 's32[1]{0}', space=sflag, size = 0x4, scoped, tag = 'scoped memory for _forward_2d.1']
    #allocation4 [shape = 's32[1]{0}', space=sflag, size = 0x4, scoped, tag = 'scoped memory for _forward_2d.1']
    #allocation5 [shape = 'u8[16384]{0}', space=vmem, size = 0x4000, scoped, tag = 'input window, operand 1, single buffered']
    #allocation6 [shape = 's32[1]{0}', space=sflag, size = 0x4, scoped, tag = 'scoped memory for _forward_2d.1']
    #allocation7 [shape = 'u8[8192]{0}', space=vmem, size = 0x2000, scoped, tag = 'output window, operand 0, single buffered']
    %8 = vsyncpa [#allocation3], 0
    %9 = vsyncpa [#allocation6], 0
    %10 = vsyncpa [#allocation4], 0
    // Predicated region
    $region2: #{_forward_2d.1} parent=1 // pred_check
      _
    $region3: #{_forward_2d.1} parent=1 // pred_check_branch
      %12 = sbr.rel (0) target = $region5
    $region4: #{_forward_2d.1} parent=1 // pred_region
      %s14 = ssub.s32 256, 256
      %15 = vsyncadd [#allocation3], %s14
      %s16 = sshll.u32 [#allocation2], 4
      %s17 = int_to_ptr.vmem [resolvable:$true] %s16
      %22 = dma.hbm_to_vmem [thread:$0]  %s0, 256, %s17, [#allocation3], 128, 128, 8
    $region5: #{_forward_2d.1} parent=1 // pred_fallthru
      _
    // Predicated region
    $region6: #{_forward_2d.1} parent=1 // pred_check
      _
    $region7: #{_forward_2d.1} parent=1 // pred_check_branch
      %24 = sbr.rel (0) target = $region9
    $region8: #{_forward_2d.1} parent=1 // pred_region
      %s26 = ssub.s32 512, 512
      %27 = vsyncadd [#allocation6], %s26
      %s28 = sshll.u32 [#allocation5], 4
      %s29 = int_to_ptr.vmem [resolvable:$true] %s28
      %34 = dma.hbm_to_vmem [thread:$0]  %s1, 512, %s29, [#allocation6], 128, 128, 8
    $region9: #{_forward_2d.1} parent=1 // pred_fallthru
      _
    // Predicated region
    $region10: #{_forward_2d.1} parent=1 // pred_check
      _
    $region11: #{_forward_2d.1} parent=1 // pred_check_branch
      %36 = sbr.rel (0) target = $region13
    $region12: #{_forward_2d.1} parent=1 // pred_region
      _
    $region13: #{_forward_2d.1} parent=1 // pred_fallthru
      _
    // Predicated region
    $region14: #{_forward_2d.1} parent=1 // pred_check
      _
    $region15: #{_forward_2d.1} parent=1 // pred_check_branch
      %38 = sbr.rel (0) target = $region17
    $region16: #{_forward_2d.1} parent=1 // pred_region
      %39 = dma.done [#allocation3], 256
    $region17: #{_forward_2d.1} parent=1 // pred_fallthru
      _
    // Predicated region
    $region18: #{_forward_2d.1} parent=1 // pred_check
      _
    $region19: #{_forward_2d.1} parent=1 // pred_check_branch
      %41 = sbr.rel (0) target = $region21
    $region20: #{_forward_2d.1} parent=1 // pred_region
      %42 = dma.done [#allocation6], 512
    $region21: #{_forward_2d.1} parent=1 // pred_fallthru
      _
    %v43 = vld [vmem:[#allocation2] sm:$0xff]
    %v44 = vld [vmem:[#allocation2 + $0x8] sm:$0xff]
    %v45 = vld [vmem:[#allocation5] sm:$0xff]
    %v46 = vld [vmem:[#allocation5 + $0x8] sm:$0xff]
    %v47 = vld [vmem:[#allocation5 + $0x10] sm:$0xff]
    %v48 = vld [vmem:[#allocation5 + $0x18] sm:$0xff]
    %v49 = vld [vmem:[%s2] sm:$0x1]
    %v51 = vlaneseq
    %v52 = vshrl.u32 %v51, 7
    %v53 = vsub.s32 0, %v52
    %v54 = vrot.slane %v49, %v53
    %vm56 = vcmask 261120
    %v58 = vsel %vm56, %v43, 0
    %v61 = vsel %vm56, %v44, 0
    %63 = vmatprep.subr.mxu0 0.0
    %64 = vmatpush1.msra.mxu0 %v45
    %65 = vmatprep.subr.mxu0 0.0
    %66 = vmatpush1.msra.mxu0 %v46
    %67 = vmatprep.subr.mxu0 0.0
    %68 = vmatpush1.msra.mxu0 %v47
    %69 = vmatprep.subr.mxu0 0.0
    %70 = vmatpush1.msra.mxu0 %v48
    %71 = vmatprep.subr.mxu0 0.0
    %72 = vmatpush1.msra.mxu0 0.0
    %73 = vmatprep.subr.mxu0 0.0
    %74 = vmatpush1.msra.mxu0 0.0
    %75 = vmatprep.subr.mxu0 0.0
    %76 = vmatpush1.msra.mxu0 0.0
    %77 = vmatprep.subr.mxu0 0.0
    %78 = vmatpush1.msra.mxu0 0.0
    %79 = vmatprep.subr.mxu0 0.0
    %80 = vmatpush1.msra.mxu0 0.0
    %81 = vmatprep.subr.mxu0 0.0
    %82 = vmatpush1.msra.mxu0 0.0
    %83 = vmatprep.subr.mxu0 0.0
    %84 = vmatpush1.msra.mxu0 0.0
    %85 = vmatprep.subr.mxu0 0.0
    %86 = vmatpush1.msra.mxu0 0.0
    %87 = vmatprep.subr.mxu0 0.0
    %88 = vmatpush1.msra.mxu0 0.0
    %89 = vmatprep.subr.mxu0 0.0
    %90 = vmatpush1.msra.mxu0 0.0
    %91 = vmatprep.subr.mxu0 0.0
    %92 = vmatpush1.msra.mxu0 0.0
    %93 = vmatprep.subr.mxu0 0.0
    %94 = vmatpush1.msra.mxu0 0.0
    %95 = vmatprep.subr.mxu0 0.0
    %96 = vmatpush1.msra.mxu0 0.0
    %97 = vmatprep.subr.mxu0 0.0
    %98 = vmatpush1.msra.mxu0 0.0
    %99 = vmatprep.subr.mxu0 0.0
    %100 = vmatpush1.msra.mxu0 0.0
    %101 = vmatprep.subr.mxu0 0.0
    %102 = vmatpush1.msra.mxu0 0.0
    %103 = vmatprep.subr.mxu0 0.0
    %104 = vmatpush1.msra.mxu0 0.0
    %105 = vmatprep.subr.mxu0 0.0
    %106 = vmatpush1.msra.mxu0 0.0
    %107 = vmatprep.subr.mxu0 0.0
    %108 = vmatpush1.msra.mxu0 0.0
    %109 = vmatprep.subr.mxu0 0.0
    %110 = vmatpush1.msra.mxu0 0.0
    %111 = vmatprep.subr.mxu0 0.0
    %112 = vmatpush1.msra.mxu0 0.0
    %113 = vmatprep.subr.mxu0 0.0
    %114 = vmatpush1.msra.mxu0 0.0
    %115 = vmatprep.subr.mxu0 0.0
    %116 = vmatpush1.msra.mxu0 0.0
    %117 = vmatprep.subr.mxu0 0.0
    %118 = vmatpush1.msra.mxu0 0.0
    %119 = vmatprep.subr.mxu0 0.0
    %120 = vmatpush1.msra.mxu0 0.0
    %121 = vmatprep.subr.mxu0 0.0
    %122 = vmatpush1.msra.mxu0 0.0
    %123 = vmatprep.subr.mxu0 0.0
    %124 = vmatpush1.msra.mxu0 0.0
    %125 = vmatprep.subr.mxu0 0.0
    %126 = vmatpush1.msra.mxu0 0.0
    %127 = vmatprep.mubr.f32.mxu0 0.0
    %128 = vmatmul.mubr.f32.gmra.mrb[0].mxu0 %v58
    %v129 = vpop.f32.mrb[0].mxu0
    %v130 = vadd.f32 %v54, %v129
    %v131 = vpop.f32.mrb[0].mxu0
    %132 = vmatprep.mubr.f32.mxu0 0.0
    %133 = vmatmul.mubr.f32.gmra.mrb[0].mxu0 %v61
    %v134 = vpop.f32.mrb[0].mxu0
    %v135 = vadd.f32 %v54, %v134
    %v136 = vpop.f32.mrb[0].mxu0
    %137 = vdwg.mxu0
    %138 = vst [vmem:[#allocation7] sm:$0xff] %v130
    %139 = vst [vmem:[#allocation7 + $0x8] sm:$0xff] %v135
    // Predicated region
    $region22: #{_forward_2d.1} parent=1 // pred_check
      _
    $region23: #{_forward_2d.1} parent=1 // pred_check_branch
      %141 = sbr.rel (0) target = $region25
    $region24: #{_forward_2d.1} parent=1 // pred_region
      %s143 = ssub.s32 256, 256
      %144 = vsyncadd [#allocation4], %s143
      %s145 = sshll.u32 [#allocation7], 4
      %s146 = int_to_ptr.vmem [resolvable:$true] %s145
      %151 = dma.vmem_to_hbm [thread:$0]  %s146, 256, %s3, [#allocation4], 128, 128, 8
    $region25: #{_forward_2d.1} parent=1 // pred_fallthru
      _
    // Predicated region
    $region26: #{_forward_2d.1} parent=1 // pred_check
      _
    $region27: #{_forward_2d.1} parent=1 // pred_check_branch
      %153 = sbr.rel (0) target = $region29
    $region28: #{_forward_2d.1} parent=1 // pred_region
      %154 = dma.done [#allocation4], 256
    $region29: #{_forward_2d.1} parent=1 // pred_fallthru
      _
    %155 = vsyncpa [#allocation3], 1
    %156 = vsyncpa [#allocation6], 1
    %157 = vsyncpa [#allocation4], 1

// kernel: _forward_2d.1
$region0: #{_forward_2d.1}
  #allocation0 [shape = 'u32[]', space=smem, size = 0x4, offset = 0x4, fixed_abs, tag = 'smem constant byte address 0x4 - core index']
  #allocation1 [shape = 'u32[144,128]{1,0:T(1,128)}', space=vmem, size = 0x12000, scoped, tag = 'internal scratch']
  %s0 = inlined_call_operand.hbm [shape: f32[16,32], index: 0, kind: input, shape index: {}]
  %s1 = inlined_call_operand.hbm [shape: f32[32,128], index: 1, kind: input, shape index: {}]
  %s2 = inlined_call_operand.vmem [shape: f32[1,128], index: 2, kind: input, shape index: {}]
  %s3 = inlined_call_operand.hbm [shape: f32[16,128], index: 3, kind: output, shape index: {}]
  %s4 = sld [smem:[#allocation0]]
  $region30: #{_forward_2d.1} parent=0
    _
  %s6 = ssub.s32 1, %s4
  %s7 = scalar_select 0, %s6, %s4
  $region1: #{_forward_2d.1} parent=0
    #allocation2 [shape = 'u8[8192]{0}', space=vmem, size = 0x2000, scoped, tag = 'input window, operand 0, single buffered']
    #allocation3 [shape = 's32[1]{0}', space=sflag, size = 0x4, scoped, tag = 'scoped memory for _forward_2d.1']
    #allocation4 [shape = 's32[1]{0}', space=sflag, size = 0x4, scoped, tag = 'scoped memory for _forward_2d.1']
    #allocation5 [shape = 'u8[16384]{0}', space=vmem, size = 0x4000, scoped, tag = 'input window, operand 1, single buffered']
    #allocation6 [shape = 's32[1]{0}', space=sflag, size = 0x4, scoped, tag = 'scoped memory for _forward_2d.1']
    #allocation7 [shape = 'u8[8192]{0}', space=vmem, size = 0x2000, scoped, tag = 'output window, operand 0, single buffered']
    %8 = vsyncpa [#allocation3], 0
    %9 = vsyncpa [#allocation6], 0
    %10 = vsyncpa [#allocation4], 0
    // Predicated region
    $region2: #{_forward_2d.1} parent=1 // pred_check
      _
    $region3: #{_forward_2d.1} parent=1 // pred_check_branch
      %12 = sbr.rel (0) target = $region5
    $region4: #{_forward_2d.1} parent=1 // pred_region
      %s14 = ssub.s32 256, 256
      %15 = vsyncadd [#allocation3], %s14
      %s16 = sshll.u32 [#allocation2], 4
      %s17 = int_to_ptr.vmem [resolvable:$true] %s16
      %22 = dma.hbm_to_vmem [thread:$0]  %s0, 256, %s17, [#allocation3], 128, 128, 8
    $region5: #{_forward_2d.1} parent=1 // pred_fallthru
      _
    // Predicated region
    $region6: #{_forward_2d.1} parent=1 // pred_check
      _
    $region7: #{_forward_2d.1} parent=1 // pred_check_branch
      %24 = sbr.rel (0) target = $region9
    $region8: #{_forward_2d.1} parent=1 // pred_region
      %s26 = ssub.s32 512, 512
      %27 = vsyncadd [#allocation6], %s26
      %s28 = sshll.u32 [#allocation5], 4
      %s29 = int_to_ptr.vmem [resolvable:$true] %s28
      %34 = dma.hbm_to_vmem [thread:$0]  %s1, 512, %s29, [#allocation6], 128, 128, 8
    $region9: #{_forward_2d.1} parent=1 // pred_fallthru
      _
    // Predicated region
    $region10: #{_forward_2d.1} parent=1 // pred_check
      _
    $region11: #{_forward_2d.1} parent=1 // pred_check_branch
      %36 = sbr.rel (0) target = $region13
    $region12: #{_forward_2d.1} parent=1 // pred_region
      _
    $region13: #{_forward_2d.1} parent=1 // pred_fallthru
      _
    // Predicated region
    $region14: #{_forward_2d.1} parent=1 // pred_check
      _
    $region15: #{_forward_2d.1} parent=1 // pred_check_branch
      %38 = sbr.rel (0) target = $region17
    $region16: #{_forward_2d.1} parent=1 // pred_region
      %39 = dma.done [#allocation3], 256
    $region17: #{_forward_2d.1} parent=1 // pred_fallthru
      _
    // Predicated region
    $region18: #{_forward_2d.1} parent=1 // pred_check
      _
    $region19: #{_forward_2d.1} parent=1 // pred_check_branch
      %41 = sbr.rel (0) target = $region21
    $region20: #{_forward_2d.1} parent=1 // pred_region
      %42 = dma.done [#allocation6], 512
    $region21: #{_forward_2d.1} parent=1 // pred_fallthru
      _
    %v43 = vld [vmem:[#allocation2] sm:$0xff]
    %v44 = vld [vmem:[#allocation2 + $0x8] sm:$0xff]
    %v45 = vld [vmem:[#allocation5] sm:$0xff]
    %v46 = vld [vmem:[#allocation5 + $0x8] sm:$0xff]
    %v47 = vld [vmem:[#allocation5 + $0x10] sm:$0xff]
    %v48 = vld [vmem:[#allocation5 + $0x18] sm:$0xff]
    %v49 = vld [vmem:[%s2] sm:$0x1]
    %v51 = vlaneseq
    %v52 = vshrl.u32 %v51, 7
    %v53 = vsub.s32 0, %v52
    %v54 = vrot.slane %v49, %v53
    %vm56 = vcmask 261120
    %v58 = vsel %vm56, %v43, 0
    %v61 = vsel %vm56, %v44, 0
    %63 = vmatprep.subr.mxu0 0.0
    %64 = vmatpush1.msra.mxu0 %v45
    %65 = vmatprep.subr.mxu0 0.0
    %66 = vmatpush1.msra.mxu0 %v46
    %67 = vmatprep.subr.mxu0 0.0
    %68 = vmatpush1.msra.mxu0 %v47
    %69 = vmatprep.subr.mxu0 0.0
    %70 = vmatpush1.msra.mxu0 %v48
    %71 = vmatprep.subr.mxu0 0.0
    %72 = vmatpush1.msra.mxu0 0.0
    %73 = vmatprep.subr.mxu0 0.0
    %74 = vmatpush1.msra.mxu0 0.0
    %75 = vmatprep.subr.mxu0 0.0
    %76 = vmatpush1.msra.mxu0 0.0
    %77 = vmatprep.subr.mxu0 0.0
    %78 = vmatpush1.msra.mxu0 0.0
    %79 = vmatprep.subr.mxu0 0.0
    %80 = vmatpush1.msra.mxu0 0.0
    %81 = vmatprep.subr.mxu0 0.0
    %82 = vmatpush1.msra.mxu0 0.0
    %83 = vmatprep.subr.mxu0 0.0
    %84 = vmatpush1.msra.mxu0 0.0
    %85 = vmatprep.subr.mxu0 0.0
    %86 = vmatpush1.msra.mxu0 0.0
    %87 = vmatprep.subr.mxu0 0.0
    %88 = vmatpush1.msra.mxu0 0.0
    %89 = vmatprep.subr.mxu0 0.0
    %90 = vmatpush1.msra.mxu0 0.0
    %91 = vmatprep.subr.mxu0 0.0
    %92 = vmatpush1.msra.mxu0 0.0
    %93 = vmatprep.subr.mxu0 0.0
    %94 = vmatpush1.msra.mxu0 0.0
    %95 = vmatprep.subr.mxu0 0.0
    %96 = vmatpush1.msra.mxu0 0.0
    %97 = vmatprep.subr.mxu0 0.0
    %98 = vmatpush1.msra.mxu0 0.0
    %99 = vmatprep.subr.mxu0 0.0
    %100 = vmatpush1.msra.mxu0 0.0
    %101 = vmatprep.subr.mxu0 0.0
    %102 = vmatpush1.msra.mxu0 0.0
    %103 = vmatprep.subr.mxu0 0.0
    %104 = vmatpush1.msra.mxu0 0.0
    %105 = vmatprep.subr.mxu0 0.0
    %106 = vmatpush1.msra.mxu0 0.0
    %107 = vmatprep.subr.mxu0 0.0
    %108 = vmatpush1.msra.mxu0 0.0
    %109 = vmatprep.subr.mxu0 0.0
    %110 = vmatpush1.msra.mxu0 0.0
    %111 = vmatprep.subr.mxu0 0.0
    %112 = vmatpush1.msra.mxu0 0.0
    %113 = vmatprep.subr.mxu0 0.0
    %114 = vmatpush1.msra.mxu0 0.0
    %115 = vmatprep.subr.mxu0 0.0
    %116 = vmatpush1.msra.mxu0 0.0
    %117 = vmatprep.subr.mxu0 0.0
    %118 = vmatpush1.msra.mxu0 0.0
    %119 = vmatprep.subr.mxu0 0.0
    %120 = vmatpush1.msra.mxu0 0.0
    %121 = vmatprep.subr.mxu0 0.0
    %122 = vmatpush1.msra.mxu0 0.0
    %123 = vmatprep.subr.mxu0 0.0
    %124 = vmatpush1.msra.mxu0 0.0
    %125 = vmatprep.subr.mxu0 0.0
    %126 = vmatpush1.msra.mxu0 0.0
    %127 = vmatprep.mubr.f32.mxu0 0.0
    %128 = vmatmul.mubr.f32.gmra.mrb[0].mxu0 %v58
    %v129 = vpop.f32.mrb[0].mxu0
    %v130 = vadd.f32 %v54, %v129
    %v131 = vpop.f32.mrb[0].mxu0
    %132 = vmatprep.mubr.f32.mxu0 0.0
    %133 = vmatmul.mubr.f32.gmra.mrb[0].mxu0 %v61
    %v134 = vpop.f32.mrb[0].mxu0
    %v135 = vadd.f32 %v54, %v134
    %v136 = vpop.f32.mrb[0].mxu0
    %137 = vdwg.mxu0
    %138 = vst [vmem:[#allocation7] sm:$0xff] %v130
    %139 = vst [vmem:[#allocation7 + $0x8] sm:$0xff] %v135
    // Predicated region
    $region22: #{_forward_2d.1} parent=1 // pred_check
      _
    $region23: #{_forward_2d.1} parent=1 // pred_check_branch
      %141 = sbr.rel (0) target = $region25
    $region24: #{_forward_2d.1} parent=1 // pred_region
      %s143 = ssub.s32 256, 256
      %144 = vsyncadd [#allocation4], %s143
      %s145 = sshll.u32 [#allocation7], 4
      %s146 = int_to_ptr.vmem [resolvable:$true] %s145
      %151 = dma.vmem_to_hbm [thread:$0]  %s146, 256, %s3, [#allocation4], 128, 128, 8
    $region25: #{_forward_2d.1} parent=1 // pred_fallthru
      _
    // Predicated region
    $region26: #{_forward_2d.1} parent=1 // pred_check
      _
    $region27: #{_forward_2d.1} parent=1 // pred_check_branch
      %153 = sbr.rel (0) target = $region29
    $region28: #{_forward_2d.1} parent=1 // pred_region
      %154 = dma.done [#allocation4], 256
    $region29: #{_forward_2d.1} parent=1 // pred_fallthru
      _
    %155 = vsyncpa [#allocation3], 1
    %156 = vsyncpa [#allocation6], 1
    %157 = vsyncpa [#allocation4], 1

</llo_original>
